<compile_context>
chip_gen: v6e
topology: v6e:2x2x1
jax: 0.10.0
libtpu: 0.0.40
codegen_flags: <defaults>
</compile_context>

<pallas_src>
import functools
import numpy as np
import jax
import jax.numpy as jnp
from jax import lax
from jax.experimental import pallas as pl
from jax.experimental.pallas import tpu as pltpu


def get_pair_directions(embed_dim):
    dirs = []
    for i in range(len(embed_dim)):
        for j in range(i + 1, len(embed_dim)):
            dirs.append((j, i))          # 'j-i' : regressor maps group j -> group i
    return dirs


def _round_up(x, m):
    return ((x + m - 1) // m) * m


# ----------------------------------------------------------------------------
# Fused kernel: block-diagonal MLP + sim loss + weight/bias penalties.
#   inputs : x_src [B, DS] bf16, x_tgt [B, DT] f32,
#            w1_blk [HT, DS] f32, w2_blk [DT, HT] f32, vec [RV, VW] f32
#   vec rows: 0=b1_cat, 1=b2_cat, 2=sim_scale, 3=s_w1, 4=s_w2,
#             8..8+2P-1 = per-pair bias rows (b1_k then b2_k), zero-padded.
#   output : [1, 1] f32 total loss
# ----------------------------------------------------------------------------
def _fused_adv_loss_kernel(x_src_ref, x_tgt_ref, w1_ref, w2_ref, vec_ref, out_ref,
                           *, n_pairs, ht, ds, dt, lamda, wl_const):
    x_src = x_src_ref[...]                       # [B, DS] bf16
    x_tgt = x_tgt_ref[...]                       # [B, DT] f32
    w1 = w1_ref[...]                             # [HT, DS] f32 (block-diag, [out,in])
    w2 = w2_ref[...]                             # [DT, HT] f32 (block-diag, [out,in])
    vec = vec_ref[...]                           # [RV, VW] f32

    b1 = vec[0:1, :ht]                           # [1, HT]
    b2 = vec[1:2, :dt]                           # [1, DT]
    sim_scale = vec[2:3, :dt]                    # [1, DT]  = 1/(B*di_k) per lane
    s_w1 = vec[3:4, :ds]                         # [1, DS]  = 1/dj_k per lane
    s_w2 = vec[4:5, :ht]                         # [1, HT]  = 1/H per lane

    # ---- fused block-diagonal 2-layer MLP for ALL pairs (bf16 MXU, f32 acc) ----
    h = lax.dot_general(x_src, w1.astype(jnp.bfloat16),
                        (((1,), (1,)), ((), ())),
                        preferred_element_type=jnp.float32)           # [B, HT]
    h = jnp.maximum(h + b1, 0.0)
    y = lax.dot_general(h.astype(jnp.bfloat16), w2.astype(jnp.bfloat16),
                        (((1,), (1,)), ((), ())),
                        preferred_element_type=jnp.float32)           # [B, DT]
    y = y + b2

    # ---- sim loss: -sum_k mean_B mean_di( x_i * y^2 ) via per-lane reciprocal ----
    prod = x_tgt * (y * y) * sim_scale                                # [B, DT]
    sim = -jnp.sum(jnp.sum(prod, axis=-1, keepdims=True),
                   axis=0, keepdims=True)                             # [1, 1]

    # ---- weight penalty (f32): sum_k mean(sum((W^T W - 1)^2, -1)) --------------
    # Block-diagonal Gram: off-block entries are exactly 0, so
    #   sum_block (g-1)^2 / in  ==  sum_block (g^2 - 2g) / in  +  in,
    # recovered with a per-lane reciprocal row + compile-time constant wl_const.
    gram1 = lax.dot_general(w1, w1, (((0,), (0,)), ((), ())),
                            preferred_element_type=jnp.float32)       # [DS, DS]
    t1 = (gram1 - 2.0) * gram1                                        # g^2 - 2g
    wl1 = jnp.sum(jnp.sum(t1 * s_w1, axis=-1, keepdims=True),
                  axis=0, keepdims=True)                              # [1, 1]

    gram2 = lax.dot_general(w2, w2, (((0,), (0,)), ((), ())),
                            preferred_element_type=jnp.float32)       # [HT, HT]
    t2 = (gram2 - 2.0) * gram2
    wl2 = jnp.sum(jnp.sum(t2 * s_w2, axis=-1, keepdims=True),
                  axis=0, keepdims=True)                              # [1, 1]

    wl = wl1 + wl2 + wl_const

    # ---- bias penalty (f32): relu(sum(b*b) - 1) per bias, one row per bias -----
    brows = vec[8:8 + 2 * n_pairs, :]                                 # [2P, VW]
    bsq = jnp.sum(brows * brows, axis=-1, keepdims=True)              # [2P, 1]
    bl = jnp.sum(jnp.maximum(bsq - 1.0, 0.0), axis=0, keepdims=True)  # [1, 1]

    out_ref[...] = sim + (wl + bl) * lamda


def adversarial_loss(inputs, params, embed_dim, lamda_weight=1000.0):
    """Fused forward pass; grad_reverse is identity in forward."""
    dirs = get_pair_directions(embed_dim)
    n_pairs = len(dirs)
    offsets = [int(sum(embed_dim[:t])) for t in range(len(embed_dim))]
    H = int(np.asarray(params[dirs[0]]['w1']).shape[0])   # hidden_dim

    x = jnp.asarray(inputs, jnp.float32)
    B = int(x.shape[0])

    src_dims = [int(embed_dim[j]) for (j, i) in dirs]
    tgt_dims = [int(embed_dim[i]) for (j, i) in dirs]
    src_off = [int(sum(src_dims[:k])) for k in range(n_pairs)]
    tgt_off = [int(sum(tgt_dims[:k])) for k in range(n_pairs)]
    DS = _round_up(sum(src_dims), 128)
    DT = _round_up(sum(tgt_dims), 128)
    HT = _round_up(n_pairs * H, 128)
    VW = max(DS, DT, HT)
    RV = _round_up(8 + 2 * n_pairs, 8)

    # --- activations: lane-dense concatenated source/target slabs (layout only) ---
    x_src = jnp.zeros((B, DS), jnp.float32)
    x_tgt = jnp.zeros((B, DT), jnp.float32)
    for k, (j, i) in enumerate(dirs):
        x_src = x_src.at[:, src_off[k]:src_off[k] + src_dims[k]].set(
            x[:, offsets[j]:offsets[j] + embed_dim[j]])
        x_tgt = x_tgt.at[:, tgt_off[k]:tgt_off[k] + tgt_dims[k]].set(
            x[:, offsets[i]:offsets[i] + embed_dim[i]])
    x_src = x_src.astype(jnp.bfloat16)       # bf16 MXU input for the MLP path

    # --- parameters: two block-diagonal weight slabs + one vector slab ------------
    w1_blk = jnp.zeros((HT, DS), jnp.float32)
    w2_blk = jnp.zeros((DT, HT), jnp.float32)
    vec = jnp.zeros((RV, VW), jnp.float32)
    sim_scale = np.zeros((VW,), np.float32)
    s_w1 = np.zeros((VW,), np.float32)
    s_w2 = np.zeros((VW,), np.float32)
    wl_const = 0.0
    for k, (j, i) in enumerate(dirs):
        p = params[(j, i)]
        dj, di = src_dims[k], tgt_dims[k]
        w1 = jnp.asarray(p['w1'], jnp.float32)            # [H, dj]  native [out, in]
        b1 = jnp.asarray(p['b1'], jnp.float32).reshape(-1)  # [H]
        w2 = jnp.asarray(p['w2'], jnp.float32)            # [di, H]  native [out, in]
        b2 = jnp.asarray(p['b2'], jnp.float32).reshape(-1)  # [di]

        w1_blk = w1_blk.at[k * H:(k + 1) * H, src_off[k]:src_off[k] + dj].set(w1)
        w2_blk = w2_blk.at[tgt_off[k]:tgt_off[k] + di, k * H:(k + 1) * H].set(w2)

        vec = vec.at[0, k * H:(k + 1) * H].set(b1)                 # b1_cat
        vec = vec.at[1, tgt_off[k]:tgt_off[k] + di].set(b2)        # b2_cat
        vec = vec.at[8 + k, :H].set(b1)                            # bias-penalty rows
        vec = vec.at[8 + n_pairs + k, :di].set(b2)

        sim_scale[tgt_off[k]:tgt_off[k] + di] = 1.0 / float(B * di)
        s_w1[src_off[k]:src_off[k] + dj] = 1.0 / float(dj)
        s_w2[k * H:(k + 1) * H] = 1.0 / float(H)
        wl_const += float(dj) + float(H)

    vec = vec.at[2, :].set(jnp.asarray(sim_scale))
    vec = vec.at[3, :].set(jnp.asarray(s_w1))
    vec = vec.at[4, :].set(jnp.asarray(s_w2))

    kernel = functools.partial(
        _fused_adv_loss_kernel,
        n_pairs=n_pairs, ht=HT, ds=DS, dt=DT,
        lamda=float(lamda_weight), wl_const=float(wl_const))

    out = pl.pallas_call(
        kernel,
        out_shape=jax.ShapeDtypeStruct((1, 1), jnp.float32),
        in_specs=[pl.BlockSpec(memory_space=pltpu.MemorySpace.VMEM)] * 5,
        out_specs=pl.BlockSpec(memory_space=pltpu.MemorySpace.VMEM),
    )(x_src, x_tgt, w1_blk, w2_blk, vec)
    return out[0, 0]


# ----------------------------------------------------------------------------
# Synthetic params (PyTorch Linear shapes) + float64 numpy reference
# ----------------------------------------------------------------------------
def init_params(key, embed_dim, hidden_dim):
    params = {}
    for (j, i) in get_pair_directions(embed_dim):
        k1, k2, k3, k4, key = jax.random.split(key, 5)
        dj, di = embed_dim[j], embed_dim[i]
        params[(j, i)] = dict(
            w1=jax.random.normal(k1, (hidden_dim, dj), jnp.float32) * (1.0 / np.sqrt(dj)),
            b1=jax.random.normal(k2, (hidden_dim,), jnp.float32) * 0.05,
            w2=jax.random.normal(k3, (di, hidden_dim), jnp.float32) * (1.0 / np.sqrt(hidden_dim)),
            b2=jax.random.normal(k4, (di,), jnp.float32) * 0.05,
        )
    return params


def adversarial_loss_ref_np(inputs, params, embed_dim, lamda_weight=1000.0):
    x = np.asarray(inputs, np.float64)
    embeds, start = [], 0
    for d in embed_dim:
        embeds.append(x[:, start:start + d])
        start += d
    sim = wl = bl = 0.0
    for (j, i) in get_pair_directions(embed_dim):
        p = params[(j, i)]
        w1 = np.asarray(p['w1'], np.float64); b1 = np.asarray(p['b1'], np.float64)
        w2 = np.asarray(p['w2'], np.float64); b2 = np.asarray(p['b2'], np.float64)
        h = np.maximum(embeds[j] @ w1.T + b1, 0.0)
        y = h @ w2.T + b2
        sim += -np.mean(np.mean(embeds[i] * np.square(y), axis=-1), axis=-1)
        for w, b in ((w1, b1), (w2, b2)):
            gram = w.T @ w
            wl += np.mean(np.sum(np.square(gram - 1.0), axis=-1))
            bl += max(float(np.sum(b * b)) - 1.0, 0.0)
    return sim + (wl + bl) * lamda_weight


if __name__ == "__main__":
    embed_dim = [16, 16, 32]     # three embedding groups -> 3 pair directions
    hidden_dim = 32
    batch = 8
    lamda_weight = 1000.0

    key = jax.random.PRNGKey(0)
    k_in, k_par = jax.random.split(key)
    inputs = jax.random.normal(k_in, (batch, sum(embed_dim)), jnp.float32)
    params = init_params(k_par, embed_dim, hidden_dim)

    loss = adversarial_loss(inputs, params, embed_dim, lamda_weight)
    loss = jax.block_until_ready(loss)

    ref = adversarial_loss_ref_np(np.asarray(inputs), params, embed_dim, lamda_weight)
    assert np.allclose(np.asarray(loss, np.float64), ref, rtol=1e-3, atol=1e-2), \
        (float(loss), float(ref))
    print("KERNEL_OK")
</pallas_src>

<mosaic_0001>
module attributes {stable_mosaic.version = 11 : i64} {
  func.func @_fused_adv_loss_kernel(%arg0: memref<8x128xbf16, #tpu.memory_space<vmem>>, %arg1: memref<8x128xf32, #tpu.memory_space<vmem>>, %arg2: memref<128x128xf32, #tpu.memory_space<vmem>>, %arg3: memref<128x128xf32, #tpu.memory_space<vmem>>, %arg4: memref<16x128xf32, #tpu.memory_space<vmem>>, %arg5: memref<1x1xf32, #tpu.memory_space<vmem>>) attributes {dimension_semantics = [], scalar_prefetch = 0 : i64, scratch_operands = 0 : i64, tpu.core_type = #tpu.core_type<tc>} {
    %c0 = arith.constant 0 : index
    %c0_0 = arith.constant 0 : index
    %0 = vector.load %arg0[%c0, %c0_0] : memref<8x128xbf16, #tpu.memory_space<vmem>>, vector<8x128xbf16>
    %c0_1 = arith.constant 0 : index
    %c0_2 = arith.constant 0 : index
    %1 = vector.load %arg1[%c0_1, %c0_2] : memref<8x128xf32, #tpu.memory_space<vmem>>, vector<8x128xf32>
    %c0_3 = arith.constant 0 : index
    %c0_4 = arith.constant 0 : index
    %2 = vector.load %arg2[%c0_3, %c0_4] : memref<128x128xf32, #tpu.memory_space<vmem>>, vector<128x128xf32>
    %c0_5 = arith.constant 0 : index
    %c0_6 = arith.constant 0 : index
    %3 = vector.load %arg3[%c0_5, %c0_6] : memref<128x128xf32, #tpu.memory_space<vmem>>, vector<128x128xf32>
    %c0_7 = arith.constant 0 : index
    %c0_8 = arith.constant 0 : index
    %4 = vector.load %arg4[%c0_7, %c0_8] : memref<16x128xf32, #tpu.memory_space<vmem>>, vector<16x128xf32>
    %5 = vector.extract_strided_slice %4 {offsets = [0, 0], sizes = [1, 128], strides = [1, 1]} : vector<16x128xf32> to vector<1x128xf32>
    %6 = vector.extract_strided_slice %4 {offsets = [1, 0], sizes = [1, 128], strides = [1, 1]} : vector<16x128xf32> to vector<1x128xf32>
    %7 = vector.extract_strided_slice %4 {offsets = [2, 0], sizes = [1, 128], strides = [1, 1]} : vector<16x128xf32> to vector<1x128xf32>
    %8 = vector.extract_strided_slice %4 {offsets = [3, 0], sizes = [1, 128], strides = [1, 1]} : vector<16x128xf32> to vector<1x128xf32>
    %9 = vector.extract_strided_slice %4 {offsets = [4, 0], sizes = [1, 128], strides = [1, 1]} : vector<16x128xf32> to vector<1x128xf32>
    %10 = arith.truncf %2 : vector<128x128xf32> to vector<128x128xbf16>
    %cst = arith.constant dense<0.000000e+00> : vector<8x128xf32>
    %11 = tpu.matmul %0, %10, %cst {dimension_numbers = #tpu.dot_dimension_numbers<[1], [1], [0], [0], [0, 0, 1, 0], [], []>} : vector<8x128xbf16>, vector<128x128xbf16>, vector<8x128xf32> -> vector<8x128xf32>
    %12 = vector.broadcast %5 : vector<1x128xf32> to vector<8x128xf32>
    %13 = arith.addf %11, %12 : vector<8x128xf32>
    %cst_9 = arith.constant 0.000000e+00 : f32
    %14 = vector.broadcast %cst_9 : f32 to vector<8x128xf32>
    %15 = arith.maximumf %13, %14 : vector<8x128xf32>
    %16 = arith.truncf %15 : vector<8x128xf32> to vector<8x128xbf16>
    %17 = arith.truncf %3 : vector<128x128xf32> to vector<128x128xbf16>
    %cst_10 = arith.constant dense<0.000000e+00> : vector<8x128xf32>
    %18 = tpu.matmul %16, %17, %cst_10 {dimension_numbers = #tpu.dot_dimension_numbers<[1], [1], [0], [0], [0, 0, 1, 0], [], []>} : vector<8x128xbf16>, vector<128x128xbf16>, vector<8x128xf32> -> vector<8x128xf32>
    %19 = vector.broadcast %6 : vector<1x128xf32> to vector<8x128xf32>
    %20 = arith.addf %18, %19 : vector<8x128xf32>
    %21 = arith.mulf %20, %20 : vector<8x128xf32>
    %22 = arith.mulf %1, %21 : vector<8x128xf32>
    %23 = vector.broadcast %7 : vector<1x128xf32> to vector<8x128xf32>
    %24 = arith.mulf %22, %23 : vector<8x128xf32>
    %cst_11 = arith.constant dense<0.000000e+00> : vector<8xf32>
    %25 = vector.multi_reduction <add>, %24, %cst_11 [1] : vector<8x128xf32> to vector<8xf32>
    %26 = vector.shape_cast %25 : vector<8xf32> to vector<8x1xf32>
    %cst_12 = arith.constant dense<0.000000e+00> : vector<1xf32>
    %27 = vector.multi_reduction <add>, %26, %cst_12 [0] : vector<8x1xf32> to vector<1xf32>
    %28 = vector.shape_cast %27 : vector<1xf32> to vector<1x1xf32>
    %cst_13 = arith.constant 0.000000e+00 : f32
    %29 = vector.broadcast %cst_13 : f32 to vector<1x1xf32>
    %30 = arith.subf %29, %28 : vector<1x1xf32>
    %cst_14 = arith.constant dense<0.000000e+00> : vector<128x128xf32>
    %31 = tpu.matmul %2, %2, %cst_14 {dimension_numbers = #tpu.dot_dimension_numbers<[0], [0], [1], [1], [0, 1, 1, 1], [], []>} : vector<128x128xf32>, vector<128x128xf32>, vector<128x128xf32> -> vector<128x128xf32>
    %cst_15 = arith.constant 2.000000e+00 : f32
    %32 = vector.broadcast %cst_15 : f32 to vector<128x128xf32>
    %33 = arith.subf %31, %32 : vector<128x128xf32>
    %34 = arith.mulf %33, %31 : vector<128x128xf32>
    %35 = vector.broadcast %8 : vector<1x128xf32> to vector<128x128xf32>
    %36 = arith.mulf %34, %35 : vector<128x128xf32>
    %cst_16 = arith.constant dense<0.000000e+00> : vector<128xf32>
    %37 = vector.multi_reduction <add>, %36, %cst_16 [1] : vector<128x128xf32> to vector<128xf32>
    %38 = vector.shape_cast %37 : vector<128xf32> to vector<128x1xf32>
    %cst_17 = arith.constant dense<0.000000e+00> : vector<1xf32>
    %39 = vector.multi_reduction <add>, %38, %cst_17 [0] : vector<128x1xf32> to vector<1xf32>
    %40 = vector.shape_cast %39 : vector<1xf32> to vector<1x1xf32>
    %cst_18 = arith.constant dense<0.000000e+00> : vector<128x128xf32>
    %41 = tpu.matmul %3, %3, %cst_18 {dimension_numbers = #tpu.dot_dimension_numbers<[0], [0], [1], [1], [0, 1, 1, 1], [], []>} : vector<128x128xf32>, vector<128x128xf32>, vector<128x128xf32> -> vector<128x128xf32>
    %cst_19 = arith.constant 2.000000e+00 : f32
    %42 = vector.broadcast %cst_19 : f32 to vector<128x128xf32>
    %43 = arith.subf %41, %42 : vector<128x128xf32>
    %44 = arith.mulf %43, %41 : vector<128x128xf32>
    %45 = vector.broadcast %9 : vector<1x128xf32> to vector<128x128xf32>
    %46 = arith.mulf %44, %45 : vector<128x128xf32>
    %cst_20 = arith.constant dense<0.000000e+00> : vector<128xf32>
    %47 = vector.multi_reduction <add>, %46, %cst_20 [1] : vector<128x128xf32> to vector<128xf32>
    %48 = vector.shape_cast %47 : vector<128xf32> to vector<128x1xf32>
    %cst_21 = arith.constant dense<0.000000e+00> : vector<1xf32>
    %49 = vector.multi_reduction <add>, %48, %cst_21 [0] : vector<128x1xf32> to vector<1xf32>
    %50 = vector.shape_cast %49 : vector<1xf32> to vector<1x1xf32>
    %51 = arith.addf %40, %50 : vector<1x1xf32>
    %cst_22 = arith.constant 1.760000e+02 : f32
    %52 = vector.broadcast %cst_22 : f32 to vector<1x1xf32>
    %53 = arith.addf %51, %52 : vector<1x1xf32>
    %54 = vector.extract_strided_slice %4 {offsets = [8, 0], sizes = [6, 128], strides = [1, 1]} : vector<16x128xf32> to vector<6x128xf32>
    %55 = arith.mulf %54, %54 : vector<6x128xf32>
    %cst_23 = arith.constant dense<0.000000e+00> : vector<6xf32>
    %56 = vector.multi_reduction <add>, %55, %cst_23 [1] : vector<6x128xf32> to vector<6xf32>
    %57 = vector.shape_cast %56 : vector<6xf32> to vector<6x1xf32>
    %cst_24 = arith.constant 1.000000e+00 : f32
    %58 = vector.broadcast %cst_24 : f32 to vector<6x1xf32>
    %59 = arith.subf %57, %58 : vector<6x1xf32>
    %cst_25 = arith.constant 0.000000e+00 : f32
    %60 = vector.broadcast %cst_25 : f32 to vector<6x1xf32>
    %61 = arith.maximumf %59, %60 : vector<6x1xf32>
    %cst_26 = arith.constant dense<0.000000e+00> : vector<1xf32>
    %62 = vector.multi_reduction <add>, %61, %cst_26 [0] : vector<6x1xf32> to vector<1xf32>
    %63 = vector.shape_cast %62 : vector<1xf32> to vector<1x1xf32>
    %64 = arith.addf %53, %63 : vector<1x1xf32>
    %cst_27 = arith.constant 1.000000e+03 : f32
    %65 = vector.broadcast %cst_27 : f32 to vector<1x1xf32>
    %66 = arith.mulf %64, %65 : vector<1x1xf32>
    %67 = arith.addf %30, %66 : vector<1x1xf32>
    %c0_28 = arith.constant 0 : index
    %c0_29 = arith.constant 0 : index
    %68 = vector.load %arg5[%c0_28, %c0_29] : memref<1x1xf32, #tpu.memory_space<vmem>>, vector<1x1xf32>
    tpu.vector_store %arg5[%c0_28, %c0_29], %67 {strides = array<i32>} : memref<1x1xf32, #tpu.memory_space<vmem>>, vector<1x1xf32>,
    return
  }
}

</mosaic_0001>

<llo_original>
// kernel: tpu_custom_call.1
$region0: #{tpu_custom_call.1}
  #allocation0 [shape = 'u32[]', space=smem, size = 0x4, offset = 0x4, fixed_abs, tag = 'smem constant byte address 0x4 - core index']
  #allocation1 [shape = 'u32[144,128]{1,0:T(1,128)}', space=vmem, size = 0x12000, scoped, tag = 'internal scratch']
  %s0 = inlined_call_operand.hbm [shape: bf16[8,128], index: 0, kind: input, shape index: {}]
  %s1 = inlined_call_operand.hbm [shape: f32[8,128], index: 1, kind: input, shape index: {}]
  %s2 = inlined_call_operand.hbm [shape: f32[128,128], index: 2, kind: input, shape index: {}]
  %s3 = inlined_call_operand.hbm [shape: f32[128,128], index: 3, kind: input, shape index: {}]
  %s4 = inlined_call_operand.hbm [shape: f32[16,128], index: 4, kind: input, shape index: {}]
  %s5 = inlined_call_operand.hbm [shape: f32[1,1], index: 5, kind: output, shape index: {}]
  %s6 = sld [smem:[#allocation0]]
  $region50: #{tpu_custom_call.1} parent=0
    _
  %s8 = ssub.s32 1, %s6
  %s9 = scalar_select 0, %s8, %s6
  $region1: #{tpu_custom_call.1} parent=0
    #allocation2 [shape = 'u8[2048]{0}', space=vmem, size = 0x800, scoped, tag = 'input window, operand 0, single buffered']
    #allocation3 [shape = 's32[1]{0}', space=sflag, size = 0x4, scoped, tag = 'scoped memory for tpu_custom_call.1']
    #allocation4 [shape = 's32[1]{0}', space=sflag, size = 0x4, scoped, tag = 'scoped memory for tpu_custom_call.1']
    #allocation5 [shape = 'u8[4096]{0}', space=vmem, size = 0x1000, scoped, tag = 'input window, operand 1, single buffered']
    #allocation6 [shape = 's32[1]{0}', space=sflag, size = 0x4, scoped, tag = 'scoped memory for tpu_custom_call.1']
    #allocation7 [shape = 'u8[65536]{0}', space=vmem, size = 0x10000, scoped, tag = 'input window, operand 2, single buffered']
    #allocation8 [shape = 'u8[65536]{0}', space=vmem, size = 0x10000, scoped, tag = 'input window, operand 3, single buffered']
    #allocation9 [shape = 's32[1]{0}', space=sflag, size = 0x4, scoped, tag = 'scoped memory for tpu_custom_call.1']
    #allocation10 [shape = 'u8[8192]{0}', space=vmem, size = 0x2000, scoped, tag = 'input window, operand 4, single buffered']
    #allocation11 [shape = 'u8[512]{0}', space=vmem, size = 0x400, scoped, tag = 'output window, operand 0, single buffered']
    %10 = vsyncpa [#allocation3], 0
    %11 = vsyncpa [#allocation6], 0
    %12 = vsyncpa [#allocation9], 0
    %13 = vsyncpa [#allocation4], 0
    // Predicated region
    $region2: #{tpu_custom_call.1} parent=1 // pred_check
      _
    $region3: #{tpu_custom_call.1} parent=1 // pred_check_branch
      %15 = sbr.rel (0) target = $region5
    $region4: #{tpu_custom_call.1} parent=1 // pred_region
      %s17 = ssub.s32 64, 64
      %18 = vsyncadd [#allocation3], %s17
      %s20 = sshll.u32 [#allocation2], 4
      %s21 = int_to_ptr.vmem [resolvable:$true] %s20
      %23 = dma.hbm_to_vmem [thread:$0]  %s0, 64, %s21, [#allocation3]
    $region5: #{tpu_custom_call.1} parent=1 // pred_fallthru
      _
    // Predicated region
    $region6: #{tpu_custom_call.1} parent=1 // pred_check
      _
    $region7: #{tpu_custom_call.1} parent=1 // pred_check_branch
      %25 = sbr.rel (0) target = $region9
    $region8: #{tpu_custom_call.1} parent=1 // pred_region
      %s27 = ssub.s32 128, 128
      %28 = vsyncadd [#allocation6], %s27
      %s30 = sshll.u32 [#allocation5], 4
      %s31 = int_to_ptr.vmem [resolvable:$true] %s30
      %33 = dma.hbm_to_vmem [thread:$0]  %s1, 128, %s31, [#allocation6]
    $region9: #{tpu_custom_call.1} parent=1 // pred_fallthru
      _
    // Predicated region
    $region10: #{tpu_custom_call.1} parent=1 // pred_check
      _
    $region11: #{tpu_custom_call.1} parent=1 // pred_check_branch
      %35 = sbr.rel (0) target = $region13
    $region12: #{tpu_custom_call.1} parent=1 // pred_region
      %s37 = ssub.s32 2048, 2048
      %38 = vsyncadd [#allocation6], %s37
      %s39 = sshll.u32 [#allocation7], 4
      %s40 = int_to_ptr.vmem [resolvable:$true] %s39
      %45 = dma.hbm_to_vmem [thread:$0]  %s2, 2048, %s40, [#allocation6], 128, 128, 8
    $region13: #{tpu_custom_call.1} parent=1 // pred_fallthru
      _
    // Predicated region
    $region14: #{tpu_custom_call.1} parent=1 // pred_check
      _
    $region15: #{tpu_custom_call.1} parent=1 // pred_check_branch
      %47 = sbr.rel (0) target = $region17
    $region16: #{tpu_custom_call.1} parent=1 // pred_region
      %s49 = ssub.s32 2048, 2048
      %50 = vsyncadd [#allocation9], %s49
      %s51 = sshll.u32 [#allocation8], 4
      %s52 = int_to_ptr.vmem [resolvable:$true] %s51
      %57 = dma.hbm_to_vmem [thread:$0]  %s3, 2048, %s52, [#allocation9], 128, 128, 8
    $region17: #{tpu_custom_call.1} parent=1 // pred_fallthru
      _
    // Predicated region
    $region18: #{tpu_custom_call.1} parent=1 // pred_check
      _
    $region19: #{tpu_custom_call.1} parent=1 // pred_check_branch
      %59 = sbr.rel (0) target = $region21
    $region20: #{tpu_custom_call.1} parent=1 // pred_region
      %s61 = ssub.s32 256, 256
      %62 = vsyncadd [#allocation9], %s61
      %s63 = sshll.u32 [#allocation10], 4
      %s64 = int_to_ptr.vmem [resolvable:$true] %s63
      %69 = dma.hbm_to_vmem [thread:$0]  %s4, 256, %s64, [#allocation9], 128, 128, 8
    $region21: #{tpu_custom_call.1} parent=1 // pred_fallthru
      _
    // Predicated region
    $region22: #{tpu_custom_call.1} parent=1 // pred_check
      _
    $region23: #{tpu_custom_call.1} parent=1 // pred_check_branch
      %71 = sbr.rel (0) target = $region25
    $region24: #{tpu_custom_call.1} parent=1 // pred_region
      %72 = dma.done [#allocation3], 64
    $region25: #{tpu_custom_call.1} parent=1 // pred_fallthru
      _
    // Predicated region
    $region26: #{tpu_custom_call.1} parent=1 // pred_check
      _
    $region27: #{tpu_custom_call.1} parent=1 // pred_check_branch
      %74 = sbr.rel (0) target = $region29
    $region28: #{tpu_custom_call.1} parent=1 // pred_region
      %75 = dma.done [#allocation6], 128
    $region29: #{tpu_custom_call.1} parent=1 // pred_fallthru
      _
    // Predicated region
    $region30: #{tpu_custom_call.1} parent=1 // pred_check
      _
    $region31: #{tpu_custom_call.1} parent=1 // pred_check_branch
      %77 = sbr.rel (0) target = $region33
    $region32: #{tpu_custom_call.1} parent=1 // pred_region
      %78 = dma.done [#allocation6], 2048
    $region33: #{tpu_custom_call.1} parent=1 // pred_fallthru
      _
    // Predicated region
    $region34: #{tpu_custom_call.1} parent=1 // pred_check
      _
    $region35: #{tpu_custom_call.1} parent=1 // pred_check_branch
      %80 = sbr.rel (0) target = $region37
    $region36: #{tpu_custom_call.1} parent=1 // pred_region
      %81 = dma.done [#allocation9], 2048
    $region37: #{tpu_custom_call.1} parent=1 // pred_fallthru
      _
    // Predicated region
    $region38: #{tpu_custom_call.1} parent=1 // pred_check
      _
    $region39: #{tpu_custom_call.1} parent=1 // pred_check_branch
      %83 = sbr.rel (0) target = $region41
    $region40: #{tpu_custom_call.1} parent=1 // pred_region
      %84 = dma.done [#allocation9], 256
    $region41: #{tpu_custom_call.1} parent=1 // pred_fallthru
      _
    %v86 = vld [vmem:[#allocation2] sm:$0xf]
    %v87 = vld [vmem:[#allocation5] sm:$0xff]
    %v88 = vld [vmem:[#allocation7] sm:$0xff]
    %v89 = vld [vmem:[#allocation7 + $0x8] sm:$0xff]
    %v90 = vld [vmem:[#allocation7 + $0x10] sm:$0xff]
    %v91 = vld [vmem:[#allocation7 + $0x18] sm:$0xff]
    %v92 = vld [vmem:[#allocation7 + $0x20] sm:$0xff]
    %v93 = vld [vmem:[#allocation7 + $0x28] sm:$0xff]
    %v94 = vld [vmem:[#allocation7 + $0x30] sm:$0xff]
    %v95 = vld [vmem:[#allocation7 + $0x38] sm:$0xff]
    %v96 = vld [vmem:[#allocation7 + $0x40] sm:$0xff]
    %v97 = vld [vmem:[#allocation7 + $0x48] sm:$0xff]
    %v98 = vld [vmem:[#allocation7 + $0x50] sm:$0xff]
    %v99 = vld [vmem:[#allocation7 + $0x58] sm:$0xff]
    %v100 = vld [vmem:[#allocation7 + $0x60] sm:$0xff]
    %v101 = vld [vmem:[#allocation7 + $0x68] sm:$0xff]
    %v102 = vld [vmem:[#allocation7 + $0x70] sm:$0xff]
    %v103 = vld [vmem:[#allocation7 + $0x78] sm:$0xff]
    %v104 = vld [vmem:[#allocation8] sm:$0xff]
    %v105 = vld [vmem:[#allocation8 + $0x8] sm:$0xff]
    %v106 = vld [vmem:[#allocation8 + $0x10] sm:$0xff]
    %v107 = vld [vmem:[#allocation8 + $0x18] sm:$0xff]
    %v108 = vld [vmem:[#allocation8 + $0x20] sm:$0xff]
    %v109 = vld [vmem:[#allocation8 + $0x28] sm:$0xff]
    %v110 = vld [vmem:[#allocation8 + $0x30] sm:$0xff]
    %v111 = vld [vmem:[#allocation8 + $0x38] sm:$0xff]
    %v112 = vld [vmem:[#allocation8 + $0x40] sm:$0xff]
    %v113 = vld [vmem:[#allocation8 + $0x48] sm:$0xff]
    %v114 = vld [vmem:[#allocation8 + $0x50] sm:$0xff]
    %v115 = vld [vmem:[#allocation8 + $0x58] sm:$0xff]
    %v116 = vld [vmem:[#allocation8 + $0x60] sm:$0xff]
    %v117 = vld [vmem:[#allocation8 + $0x68] sm:$0xff]
    %v118 = vld [vmem:[#allocation8 + $0x70] sm:$0xff]
    %v119 = vld [vmem:[#allocation8 + $0x78] sm:$0xff]
    %v120 = vld [vmem:[#allocation10] sm:$0xff]
    %v121 = vld [vmem:[#allocation10 + $0x8] sm:$0xff]
    %v122 = vpack.c.bf16 %v89, %v88
    %v123 = vpack.c.bf16 %v91, %v90
    %v124 = vpack.c.bf16 %v93, %v92
    %v125 = vpack.c.bf16 %v95, %v94
    %v126 = vpack.c.bf16 %v97, %v96
    %v127 = vpack.c.bf16 %v99, %v98
    %v128 = vpack.c.bf16 %v101, %v100
    %v129 = vpack.c.bf16 %v103, %v102
    %v130 = vlaneseq
    %v131 = vshrl.u32 %v130, 7
    %v132 = vsub.s32 0, %v131
    %v133 = vrot.slane %v120, %v132
    %134 = vmatprep.subr.bf16.mxu0 0
    %135 = vmatpush1.bf16.xpose.msra.mxu0 %v129
    %136 = vmatprep.subr.bf16.mxu0 0
    %137 = vmatpush1.bf16.xpose.msra.mxu0 %v128
    %138 = vmatprep.subr.bf16.mxu0 0
    %139 = vmatpush1.bf16.xpose.msra.mxu0 %v127
    %140 = vmatprep.subr.bf16.mxu0 0
    %141 = vmatpush1.bf16.xpose.msra.mxu0 %v126
    %142 = vmatprep.subr.bf16.mxu0 0
    %143 = vmatpush1.bf16.xpose.msra.mxu0 %v125
    %144 = vmatprep.subr.bf16.mxu0 0
    %145 = vmatpush1.bf16.xpose.msra.mxu0 %v124
    %146 = vmatprep.subr.bf16.mxu0 0
    %147 = vmatpush1.bf16.xpose.msra.mxu0 %v123
    %148 = vmatprep.subr.bf16.mxu0 0
    %149 = vmatpush1.bf16.xpose.msra.mxu0 %v122
    %150 = vmatprep.subr.bf16.mxu0 0
    %151 = vmatpush2.bf16.xpose.msra.mxu0 0
    %152 = vmatprep.subr.bf16.mxu0 0
    %153 = vmatpush2.bf16.xpose.msra.mxu0 0
    %154 = vmatprep.subr.bf16.mxu0 0
    %155 = vmatpush2.bf16.xpose.msra.mxu0 0
    %156 = vmatprep.subr.bf16.mxu0 0
    %157 = vmatpush2.bf16.xpose.msra.mxu0 0
    %158 = vmatprep.subr.bf16.mxu0 0
    %159 = vmatpush2.bf16.xpose.msra.mxu0 0
    %160 = vmatprep.subr.bf16.mxu0 0
    %161 = vmatpush2.bf16.xpose.msra.mxu0 0
    %162 = vmatprep.subr.bf16.mxu0 0
    %163 = vmatpush2.bf16.xpose.msra.mxu0 0
    %164 = vmatprep.subr.bf16.mxu0 0
    %165 = vmatpush2.bf16.xpose.msra.mxu0 0
    %166 = vmatprep.mubr.bf16.mxu0 0
    %167 = vmatmul.mubr.bf16.gmra.mxu0 %v86
    %v168 = vpop.f32.mrf.mxu0
    %v169 = vadd.f32 %v133, %v168
    %v170 = vpop.f32.mrf.mxu0
    %v171 = vpop.f32.mrf.mxu0
    %v172 = vpop.f32.mrf.mxu0
    %173 = vdwg.mxu0
    %v174 = vmax.f32 %v169, 0.0
    %v175 = vpack.c.bf16 %v174, %v174
    %v176 = vpack.c.bf16 %v105, %v104
    %v177 = vpack.c.bf16 %v107, %v106
    %v178 = vpack.c.bf16 %v109, %v108
    %v179 = vpack.c.bf16 %v111, %v110
    %v180 = vpack.c.bf16 %v113, %v112
    %v181 = vpack.c.bf16 %v115, %v114
    %v182 = vpack.c.bf16 %v117, %v116
    %v183 = vpack.c.bf16 %v119, %v118
    %v184 = vlaneseq
    %v185 = vshrl.u32 %v184, 7
    %v186 = vsub.s32 1, %v185
    %v187 = vrot.slane %v120, %v186
    %188 = vmatprep.subr.bf16.mxu0 0
    %189 = vmatpush1.bf16.xpose.msra.mxu0 %v183
    %190 = vmatprep.subr.bf16.mxu0 0
    %191 = vmatpush1.bf16.xpose.msra.mxu0 %v182
    %192 = vmatprep.subr.bf16.mxu0 0
    %193 = vmatpush1.bf16.xpose.msra.mxu0 %v181
    %194 = vmatprep.subr.bf16.mxu0 0
    %195 = vmatpush1.bf16.xpose.msra.mxu0 %v180
    %196 = vmatprep.subr.bf16.mxu0 0
    %197 = vmatpush1.bf16.xpose.msra.mxu0 %v179
    %198 = vmatprep.subr.bf16.mxu0 0
    %199 = vmatpush1.bf16.xpose.msra.mxu0 %v178
    %200 = vmatprep.subr.bf16.mxu0 0
    %201 = vmatpush1.bf16.xpose.msra.mxu0 %v177
    %202 = vmatprep.subr.bf16.mxu0 0
    %203 = vmatpush1.bf16.xpose.msra.mxu0 %v176
    %204 = vmatprep.subr.bf16.mxu0 0
    %205 = vmatpush2.bf16.xpose.msra.mxu0 0
    %206 = vmatprep.subr.bf16.mxu0 0
    %207 = vmatpush2.bf16.xpose.msra.mxu0 0
    %208 = vmatprep.subr.bf16.mxu0 0
    %209 = vmatpush2.bf16.xpose.msra.mxu0 0
    %210 = vmatprep.subr.bf16.mxu0 0
    %211 = vmatpush2.bf16.xpose.msra.mxu0 0
    %212 = vmatprep.subr.bf16.mxu0 0
    %213 = vmatpush2.bf16.xpose.msra.mxu0 0
    %214 = vmatprep.subr.bf16.mxu0 0
    %215 = vmatpush2.bf16.xpose.msra.mxu0 0
    %216 = vmatprep.subr.bf16.mxu0 0
    %217 = vmatpush2.bf16.xpose.msra.mxu0 0
    %218 = vmatprep.subr.bf16.mxu0 0
    %219 = vmatpush2.bf16.xpose.msra.mxu0 0
    %220 = vmatprep.mubr.bf16.mxu0 0
    %221 = vmatmul.mubr.bf16.gmra.mxu0 %v175
    %v222 = vpop.f32.mrf.mxu0
    %v223 = vadd.f32 %v187, %v222
    %v224 = vpop.f32.mrf.mxu0
    %v225 = vpop.f32.mrf.mxu0
    %v226 = vpop.f32.mrf.mxu0
    %227 = vdwg.mxu0
    %v228 = vmul.f32 %v223, %v223
    %v229 = vmul.f32 %v87, %v228
    %v230 = vlaneseq
    %v231 = vshrl.u32 %v230, 7
    %v232 = vsub.s32 2, %v231
    %v233 = vrot.slane %v120, %v232
    %v234 = vmul.f32 %v229, %v233
    %235 = vadd.xlane.f32.xlu0 %v234
    %v236 = vpop.xlane.xlu0 %235
    %v237 = vrot.slane %v236, 4
    %v238 = vadd.f32 %v236, %v237
    %v239 = vrot.slane %v238, 2
    %v240 = vadd.f32 %v238, %v239
    %v241 = vrot.slane %v240, 1
    %v242 = vadd.f32 %v240, %v241
    %v243 = vsub.f32 0.0, %v242
    %244 = vxpose.xlu0.b32.start [1/16] %v88, 128
    %245 = vxpose.xlu0.b32.cont [2/16] %v89, 128
    %246 = vxpose.xlu0.b32.cont [3/16] %v90, 128
    %247 = vxpose.xlu0.b32.cont [4/16] %v91, 128
    %248 = vxpose.xlu0.b32.cont [5/16] %v92, 128
    %249 = vxpose.xlu0.b32.cont [6/16] %v93, 128
    %250 = vxpose.xlu0.b32.cont [7/16] %v94, 128
    %251 = vxpose.xlu0.b32.cont [8/16] %v95, 128
    %252 = vxpose.xlu0.b32.cont [9/16] %v96, 128
    %253 = vxpose.xlu0.b32.cont [10/16] %v97, 128
    %254 = vxpose.xlu0.b32.cont [11/16] %v98, 128
    %255 = vxpose.xlu0.b32.cont [12/16] %v99, 128
    %256 = vxpose.xlu0.b32.cont [13/16] %v100, 128
    %257 = vxpose.xlu0.b32.cont [14/16] %v101, 128
    %258 = vxpose.xlu0.b32.cont [15/16] %v102, 128
    %259 = vxpose.xlu0.b32.end [16/16] %v103, 128
    %v260 = vpop.trf.xlu0
    %v261 = vpop.trf.xlu0
    %v262 = vpop.trf.xlu0
    %v263 = vpop.trf.xlu0
    %v264 = vpop.trf.xlu0
    %v265 = vpop.trf.xlu0
    %v266 = vpop.trf.xlu0
    %v267 = vpop.trf.xlu0
    %v268 = vpop.trf.xlu0
    %v269 = vpop.trf.xlu0
    %v270 = vpop.trf.xlu0
    %v271 = vpop.trf.xlu0
    %v272 = vpop.trf.xlu0
    %v273 = vpop.trf.xlu0
    %v274 = vpop.trf.xlu0
    %v275 = vpop.trf.xlu0
    %276 = vmatprep.subr.mxu0 0.0
    %277 = vmatpush1.msra.mxu0 %v103
    %278 = vmatprep.subr.mxu0 0.0
    %279 = vmatpush1.msra.mxu0 %v102
    %280 = vmatprep.subr.mxu0 0.0
    %281 = vmatpush1.msra.mxu0 %v101
    %282 = vmatprep.subr.mxu0 0.0
    %283 = vmatpush1.msra.mxu0 %v100
    %284 = vmatprep.subr.mxu0 0.0
    %285 = vmatpush1.msra.mxu0 %v99
    %286 = vmatprep.subr.mxu0 0.0
    %287 = vmatpush1.msra.mxu0 %v98
    %288 = vmatprep.subr.mxu0 0.0
    %289 = vmatpush1.msra.mxu0 %v97
    %290 = vmatprep.subr.mxu0 0.0
    %291 = vmatpush1.msra.mxu0 %v96
    %292 = vmatprep.subr.mxu0 0.0
    %293 = vmatpush1.msra.mxu0 %v95
    %294 = vmatprep.subr.mxu0 0.0
    %295 = vmatpush1.msra.mxu0 %v94
    %296 = vmatprep.subr.mxu0 0.0
    %297 = vmatpush1.msra.mxu0 %v93
    %298 = vmatprep.subr.mxu0 0.0
    %299 = vmatpush1.msra.mxu0 %v92
    %300 = vmatprep.subr.mxu0 0.0
    %301 = vmatpush1.msra.mxu0 %v91
    %302 = vmatprep.subr.mxu0 0.0
    %303 = vmatpush1.msra.mxu0 %v90
    %304 = vmatprep.subr.mxu0 0.0
    %305 = vmatpush1.msra.mxu0 %v89
    %306 = vmatprep.subr.mxu0 0.0
    %307 = vmatpush1.msra.mxu0 %v88
    %308 = vmatprep.subr.mxu0 0.0
    %309 = vmatpush2.msra.mxu0 0.0
    %310 = vmatprep.subr.mxu0 0.0
    %311 = vmatpush2.msra.mxu0 0.0
    %312 = vmatprep.subr.mxu0 0.0
    %313 = vmatpush2.msra.mxu0 0.0
    %314 = vmatprep.subr.mxu0 0.0
    %315 = vmatpush2.msra.mxu0 0.0
    %316 = vmatprep.subr.mxu0 0.0
    %317 = vmatpush2.msra.mxu0 0.0
    %318 = vmatprep.subr.mxu0 0.0
    %319 = vmatpush2.msra.mxu0 0.0
    %320 = vmatprep.subr.mxu0 0.0
    %321 = vmatpush2.msra.mxu0 0.0
    %322 = vmatprep.subr.mxu0 0.0
    %323 = vmatpush2.msra.mxu0 0.0
    %324 = vmatprep.subr.mxu0 0.0
    %325 = vmatpush2.msra.mxu0 0.0
    %326 = vmatprep.subr.mxu0 0.0
    %327 = vmatpush2.msra.mxu0 0.0
    %328 = vmatprep.subr.mxu0 0.0
    %329 = vmatpush2.msra.mxu0 0.0
    %330 = vmatprep.subr.mxu0 0.0
    %331 = vmatpush2.msra.mxu0 0.0
    %332 = vmatprep.subr.mxu0 0.0
    %333 = vmatpush2.msra.mxu0 0.0
    %334 = vmatprep.subr.mxu0 0.0
    %335 = vmatpush2.msra.mxu0 0.0
    %336 = vmatprep.subr.mxu0 0.0
    %337 = vmatpush2.msra.mxu0 0.0
    %338 = vmatprep.subr.mxu0 0.0
    %339 = vmatpush2.msra.mxu0 0.0
    %340 = vmatprep.mubr.f32.mxu0 0.0
    %341 = vmatmul.mubr.f32.gmra.mxu0 %v260
    %v342 = vpop.f32.mrf.mxu0
    %v343 = vadd.f32 0.0, %v342
    %v344 = vpop.f32.mrf.mxu0
    %345 = vmatprep.mubr.f32.mxu0 0.0
    %346 = vmatmul.mubr.f32.gmra.mxu0 %v261
    %v347 = vpop.f32.mrf.mxu0
    %v348 = vadd.f32 0.0, %v347
    %v349 = vpop.f32.mrf.mxu0
    %350 = vmatprep.mubr.f32.mxu0 0.0
    %351 = vmatmul.mubr.f32.gmra.mxu0 %v262
    %v352 = vpop.f32.mrf.mxu0
    %v353 = vadd.f32 0.0, %v352
    %v354 = vpop.f32.mrf.mxu0
    %355 = vmatprep.mubr.f32.mxu0 0.0
    %356 = vmatmul.mubr.f32.gmra.mxu0 %v263
    %v357 = vpop.f32.mrf.mxu0
    %v358 = vadd.f32 0.0, %v357
    %v359 = vpop.f32.mrf.mxu0
    %360 = vmatprep.mubr.f32.mxu0 0.0
    %361 = vmatmul.mubr.f32.gmra.mxu0 %v264
    %v362 = vpop.f32.mrf.mxu0
    %v363 = vadd.f32 0.0, %v362
    %v364 = vpop.f32.mrf.mxu0
    %365 = vmatprep.mubr.f32.mxu0 0.0
    %366 = vmatmul.mubr.f32.gmra.mxu0 %v265
    %v367 = vpop.f32.mrf.mxu0
    %v368 = vadd.f32 0.0, %v367
    %v369 = vpop.f32.mrf.mxu0
    %370 = vmatprep.mubr.f32.mxu0 0.0
    %371 = vmatmul.mubr.f32.gmra.mxu0 %v266
    %v372 = vpop.f32.mrf.mxu0
    %v373 = vadd.f32 0.0, %v372
    %v374 = vpop.f32.mrf.mxu0
    %375 = vmatprep.mubr.f32.mxu0 0.0
    %376 = vmatmul.mubr.f32.gmra.mxu0 %v267
    %v377 = vpop.f32.mrf.mxu0
    %v378 = vadd.f32 0.0, %v377
    %v379 = vpop.f32.mrf.mxu0
    %380 = vmatprep.mubr.f32.mxu0 0.0
    %381 = vmatmul.mubr.f32.gmra.mxu0 %v268
    %v382 = vpop.f32.mrf.mxu0
    %v383 = vadd.f32 0.0, %v382
    %v384 = vpop.f32.mrf.mxu0
    %385 = vmatprep.mubr.f32.mxu0 0.0
    %386 = vmatmul.mubr.f32.gmra.mxu0 %v269
    %v387 = vpop.f32.mrf.mxu0
    %v388 = vadd.f32 0.0, %v387
    %v389 = vpop.f32.mrf.mxu0
    %390 = vmatprep.mubr.f32.mxu0 0.0
    %391 = vmatmul.mubr.f32.gmra.mxu0 %v270
    %v392 = vpop.f32.mrf.mxu0
    %v393 = vadd.f32 0.0, %v392
    %v394 = vpop.f32.mrf.mxu0
    %395 = vmatprep.mubr.f32.mxu0 0.0
    %396 = vmatmul.mubr.f32.gmra.mxu0 %v271
    %v397 = vpop.f32.mrf.mxu0
    %v398 = vadd.f32 0.0, %v397
    %v399 = vpop.f32.mrf.mxu0
    %400 = vmatprep.mubr.f32.mxu0 0.0
    %401 = vmatmul.mubr.f32.gmra.mxu0 %v272
    %v402 = vpop.f32.mrf.mxu0
    %v403 = vadd.f32 0.0, %v402
    %v404 = vpop.f32.mrf.mxu0
    %405 = vmatprep.mubr.f32.mxu0 0.0
    %406 = vmatmul.mubr.f32.gmra.mxu0 %v273
    %v407 = vpop.f32.mrf.mxu0
    %v408 = vadd.f32 0.0, %v407
    %v409 = vpop.f32.mrf.mxu0
    %410 = vmatprep.mubr.f32.mxu0 0.0
    %411 = vmatmul.mubr.f32.gmra.mxu0 %v274
    %v412 = vpop.f32.mrf.mxu0
    %v413 = vadd.f32 0.0, %v412
    %v414 = vpop.f32.mrf.mxu0
    %415 = vmatprep.mubr.f32.mxu0 0.0
    %416 = vmatmul.mubr.f32.gmra.mxu0 %v275
    %v417 = vpop.f32.mrf.mxu0
    %v418 = vadd.f32 0.0, %v417
    %v419 = vpop.f32.mrf.mxu0
    %420 = vdwg.mxu0
    %v421 = vsub.f32 %v343, 2.0
    %v422 = vsub.f32 %v348, 2.0
    %v423 = vsub.f32 %v353, 2.0
    %v424 = vsub.f32 %v358, 2.0
    %v425 = vsub.f32 %v363, 2.0
    %v426 = vsub.f32 %v368, 2.0
    %v427 = vsub.f32 %v373, 2.0
    %v428 = vsub.f32 %v378, 2.0
    %v429 = vsub.f32 %v383, 2.0
    %v430 = vsub.f32 %v388, 2.0
    %v431 = vsub.f32 %v393, 2.0
    %v432 = vsub.f32 %v398, 2.0
    %v433 = vsub.f32 %v403, 2.0
    %v434 = vsub.f32 %v408, 2.0
    %v435 = vsub.f32 %v413, 2.0
    %v436 = vsub.f32 %v418, 2.0
    %v437 = vmul.f32 %v421, %v343
    %v438 = vmul.f32 %v422, %v348
    %v439 = vmul.f32 %v423, %v353
    %v440 = vmul.f32 %v424, %v358
    %v441 = vmul.f32 %v425, %v363
    %v442 = vmul.f32 %v426, %v368
    %v443 = vmul.f32 %v427, %v373
    %v444 = vmul.f32 %v428, %v378
    %v445 = vmul.f32 %v429, %v383
    %v446 = vmul.f32 %v430, %v388
    %v447 = vmul.f32 %v431, %v393
    %v448 = vmul.f32 %v432, %v398
    %v449 = vmul.f32 %v433, %v403
    %v450 = vmul.f32 %v434, %v408
    %v451 = vmul.f32 %v435, %v413
    %v452 = vmul.f32 %v436, %v418
    %v453 = vlaneseq
    %v454 = vshrl.u32 %v453, 7
    %v455 = vsub.s32 3, %v454
    %v456 = vrot.slane %v120, %v455
    %v457 = vmul.f32 %v437, %v456
    %v458 = vmul.f32 %v438, %v456
    %v459 = vmul.f32 %v439, %v456
    %v460 = vmul.f32 %v440, %v456
    %v461 = vmul.f32 %v441, %v456
    %v462 = vmul.f32 %v442, %v456
    %v463 = vmul.f32 %v443, %v456
    %v464 = vmul.f32 %v444, %v456
    %v465 = vmul.f32 %v445, %v456
    %v466 = vmul.f32 %v446, %v456
    %v467 = vmul.f32 %v447, %v456
    %v468 = vmul.f32 %v448, %v456
    %v469 = vmul.f32 %v449, %v456
    %v470 = vmul.f32 %v450, %v456
    %v471 = vmul.f32 %v451, %v456
    %v472 = vmul.f32 %v452, %v456
    %473 = vadd.xlane.f32.xlu0 %v457
    %v474 = vpop.xlane.xlu0 %473
    %475 = vadd.xlane.f32.xlu0 %v458
    %v476 = vpop.xlane.xlu0 %475
    %477 = vadd.xlane.f32.xlu0 %v459
    %v478 = vpop.xlane.xlu0 %477
    %479 = vadd.xlane.f32.xlu0 %v460
    %v480 = vpop.xlane.xlu0 %479
    %481 = vadd.xlane.f32.xlu0 %v461
    %v482 = vpop.xlane.xlu0 %481
    %483 = vadd.xlane.f32.xlu0 %v462
    %v484 = vpop.xlane.xlu0 %483
    %485 = vadd.xlane.f32.xlu0 %v463
    %v486 = vpop.xlane.xlu0 %485
    %487 = vadd.xlane.f32.xlu0 %v464
    %v488 = vpop.xlane.xlu0 %487
    %489 = vadd.xlane.f32.xlu0 %v465
    %v490 = vpop.xlane.xlu0 %489
    %491 = vadd.xlane.f32.xlu0 %v466
    %v492 = vpop.xlane.xlu0 %491
    %493 = vadd.xlane.f32.xlu0 %v467
    %v494 = vpop.xlane.xlu0 %493
    %495 = vadd.xlane.f32.xlu0 %v468
    %v496 = vpop.xlane.xlu0 %495
    %497 = vadd.xlane.f32.xlu0 %v469
    %v498 = vpop.xlane.xlu0 %497
    %499 = vadd.xlane.f32.xlu0 %v470
    %v500 = vpop.xlane.xlu0 %499
    %501 = vadd.xlane.f32.xlu0 %v471
    %v502 = vpop.xlane.xlu0 %501
    %503 = vadd.xlane.f32.xlu0 %v472
    %v504 = vpop.xlane.xlu0 %503
    %v505 = vadd.f32 %v474, %v476
    %v506 = vadd.f32 %v505, %v478
    %v507 = vadd.f32 %v506, %v480
    %v508 = vadd.f32 %v507, %v482
    %v509 = vadd.f32 %v508, %v484
    %v510 = vadd.f32 %v509, %v486
    %v511 = vadd.f32 %v510, %v488
    %v512 = vadd.f32 %v511, %v490
    %v513 = vadd.f32 %v512, %v492
    %v514 = vadd.f32 %v513, %v494
    %v515 = vadd.f32 %v514, %v496
    %v516 = vadd.f32 %v515, %v498
    %v517 = vadd.f32 %v516, %v500
    %v518 = vadd.f32 %v517, %v502
    %v519 = vadd.f32 %v518, %v504
    %v520 = vrot.slane %v519, 4
    %v521 = vadd.f32 %v519, %v520
    %v522 = vrot.slane %v521, 2
    %v523 = vadd.f32 %v521, %v522
    %v524 = vrot.slane %v523, 1
    %v525 = vadd.f32 %v523, %v524
    %526 = vxpose.xlu0.b32.start [1/16] %v104, 128
    %527 = vxpose.xlu0.b32.cont [2/16] %v105, 128
    %528 = vxpose.xlu0.b32.cont [3/16] %v106, 128
    %529 = vxpose.xlu0.b32.cont [4/16] %v107, 128
    %530 = vxpose.xlu0.b32.cont [5/16] %v108, 128
    %531 = vxpose.xlu0.b32.cont [6/16] %v109, 128
    %532 = vxpose.xlu0.b32.cont [7/16] %v110, 128
    %533 = vxpose.xlu0.b32.cont [8/16] %v111, 128
    %534 = vxpose.xlu0.b32.cont [9/16] %v112, 128
    %535 = vxpose.xlu0.b32.cont [10/16] %v113, 128
    %536 = vxpose.xlu0.b32.cont [11/16] %v114, 128
    %537 = vxpose.xlu0.b32.cont [12/16] %v115, 128
    %538 = vxpose.xlu0.b32.cont [13/16] %v116, 128
    %539 = vxpose.xlu0.b32.cont [14/16] %v117, 128
    %540 = vxpose.xlu0.b32.cont [15/16] %v118, 128
    %541 = vxpose.xlu0.b32.end [16/16] %v119, 128
    %v542 = vpop.trf.xlu0
    %v543 = vpop.trf.xlu0
    %v544 = vpop.trf.xlu0
    %v545 = vpop.trf.xlu0
    %v546 = vpop.trf.xlu0
    %v547 = vpop.trf.xlu0
    %v548 = vpop.trf.xlu0
    %v549 = vpop.trf.xlu0
    %v550 = vpop.trf.xlu0
    %v551 = vpop.trf.xlu0
    %v552 = vpop.trf.xlu0
    %v553 = vpop.trf.xlu0
    %v554 = vpop.trf.xlu0
    %v555 = vpop.trf.xlu0
    %v556 = vpop.trf.xlu0
    %v557 = vpop.trf.xlu0
    %558 = vmatprep.subr.mxu0 0.0
    %559 = vmatpush1.msra.mxu0 %v119
    %560 = vmatprep.subr.mxu0 0.0
    %561 = vmatpush1.msra.mxu0 %v118
    %562 = vmatprep.subr.mxu0 0.0
    %563 = vmatpush1.msra.mxu0 %v117
    %564 = vmatprep.subr.mxu0 0.0
    %565 = vmatpush1.msra.mxu0 %v116
    %566 = vmatprep.subr.mxu0 0.0
    %567 = vmatpush1.msra.mxu0 %v115
    %568 = vmatprep.subr.mxu0 0.0
    %569 = vmatpush1.msra.mxu0 %v114
    %570 = vmatprep.subr.mxu0 0.0
    %571 = vmatpush1.msra.mxu0 %v113
    %572 = vmatprep.subr.mxu0 0.0
    %573 = vmatpush1.msra.mxu0 %v112
    %574 = vmatprep.subr.mxu0 0.0
    %575 = vmatpush1.msra.mxu0 %v111
    %576 = vmatprep.subr.mxu0 0.0
    %577 = vmatpush1.msra.mxu0 %v110
    %578 = vmatprep.subr.mxu0 0.0
    %579 = vmatpush1.msra.mxu0 %v109
    %580 = vmatprep.subr.mxu0 0.0
    %581 = vmatpush1.msra.mxu0 %v108
    %582 = vmatprep.subr.mxu0 0.0
    %583 = vmatpush1.msra.mxu0 %v107
    %584 = vmatprep.subr.mxu0 0.0
    %585 = vmatpush1.msra.mxu0 %v106
    %586 = vmatprep.subr.mxu0 0.0
    %587 = vmatpush1.msra.mxu0 %v105
    %588 = vmatprep.subr.mxu0 0.0
    %589 = vmatpush1.msra.mxu0 %v104
    %590 = vmatprep.subr.mxu0 0.0
    %591 = vmatpush2.msra.mxu0 0.0
    %592 = vmatprep.subr.mxu0 0.0
    %593 = vmatpush2.msra.mxu0 0.0
    %594 = vmatprep.subr.mxu0 0.0
    %595 = vmatpush2.msra.mxu0 0.0
    %596 = vmatprep.subr.mxu0 0.0
    %597 = vmatpush2.msra.mxu0 0.0
    %598 = vmatprep.subr.mxu0 0.0
    %599 = vmatpush2.msra.mxu0 0.0
    %600 = vmatprep.subr.mxu0 0.0
    %601 = vmatpush2.msra.mxu0 0.0
    %602 = vmatprep.subr.mxu0 0.0
    %603 = vmatpush2.msra.mxu0 0.0
    %604 = vmatprep.subr.mxu0 0.0
    %605 = vmatpush2.msra.mxu0 0.0
    %606 = vmatprep.subr.mxu0 0.0
    %607 = vmatpush2.msra.mxu0 0.0
    %608 = vmatprep.subr.mxu0 0.0
    %609 = vmatpush2.msra.mxu0 0.0
    %610 = vmatprep.subr.mxu0 0.0
    %611 = vmatpush2.msra.mxu0 0.0
    %612 = vmatprep.subr.mxu0 0.0
    %613 = vmatpush2.msra.mxu0 0.0
    %614 = vmatprep.subr.mxu0 0.0
    %615 = vmatpush2.msra.mxu0 0.0
    %616 = vmatprep.subr.mxu0 0.0
    %617 = vmatpush2.msra.mxu0 0.0
    %618 = vmatprep.subr.mxu0 0.0
    %619 = vmatpush2.msra.mxu0 0.0
    %620 = vmatprep.subr.mxu0 0.0
    %621 = vmatpush2.msra.mxu0 0.0
    %622 = vmatprep.mubr.f32.mxu0 0.0
    %623 = vmatmul.mubr.f32.gmra.mxu0 %v542
    %v624 = vpop.f32.mrf.mxu0
    %v625 = vadd.f32 0.0, %v624
    %v626 = vpop.f32.mrf.mxu0
    %627 = vmatprep.mubr.f32.mxu0 0.0
    %628 = vmatmul.mubr.f32.gmra.mxu0 %v543
    %v629 = vpop.f32.mrf.mxu0
    %v630 = vadd.f32 0.0, %v629
    %v631 = vpop.f32.mrf.mxu0
    %632 = vmatprep.mubr.f32.mxu0 0.0
    %633 = vmatmul.mubr.f32.gmra.mxu0 %v544
    %v634 = vpop.f32.mrf.mxu0
    %v635 = vadd.f32 0.0, %v634
    %v636 = vpop.f32.mrf.mxu0
    %637 = vmatprep.mubr.f32.mxu0 0.0
    %638 = vmatmul.mubr.f32.gmra.mxu0 %v545
    %v639 = vpop.f32.mrf.mxu0
    %v640 = vadd.f32 0.0, %v639
    %v641 = vpop.f32.mrf.mxu0
    %642 = vmatprep.mubr.f32.mxu0 0.0
    %643 = vmatmul.mubr.f32.gmra.mxu0 %v546
    %v644 = vpop.f32.mrf.mxu0
    %v645 = vadd.f32 0.0, %v644
    %v646 = vpop.f32.mrf.mxu0
    %647 = vmatprep.mubr.f32.mxu0 0.0
    %648 = vmatmul.mubr.f32.gmra.mxu0 %v547
    %v649 = vpop.f32.mrf.mxu0
    %v650 = vadd.f32 0.0, %v649
    %v651 = vpop.f32.mrf.mxu0
    %652 = vmatprep.mubr.f32.mxu0 0.0
    %653 = vmatmul.mubr.f32.gmra.mxu0 %v548
    %v654 = vpop.f32.mrf.mxu0
    %v655 = vadd.f32 0.0, %v654
    %v656 = vpop.f32.mrf.mxu0
    %657 = vmatprep.mubr.f32.mxu0 0.0
    %658 = vmatmul.mubr.f32.gmra.mxu0 %v549
    %v659 = vpop.f32.mrf.mxu0
    %v660 = vadd.f32 0.0, %v659
    %v661 = vpop.f32.mrf.mxu0
    %662 = vmatprep.mubr.f32.mxu0 0.0
    %663 = vmatmul.mubr.f32.gmra.mxu0 %v550
    %v664 = vpop.f32.mrf.mxu0
    %v665 = vadd.f32 0.0, %v664
    %v666 = vpop.f32.mrf.mxu0
    %667 = vmatprep.mubr.f32.mxu0 0.0
    %668 = vmatmul.mubr.f32.gmra.mxu0 %v551
    %v669 = vpop.f32.mrf.mxu0
    %v670 = vadd.f32 0.0, %v669
    %v671 = vpop.f32.mrf.mxu0
    %672 = vmatprep.mubr.f32.mxu0 0.0
    %673 = vmatmul.mubr.f32.gmra.mxu0 %v552
    %v674 = vpop.f32.mrf.mxu0
    %v675 = vadd.f32 0.0, %v674
    %v676 = vpop.f32.mrf.mxu0
    %677 = vmatprep.mubr.f32.mxu0 0.0
    %678 = vmatmul.mubr.f32.gmra.mxu0 %v553
    %v679 = vpop.f32.mrf.mxu0
    %v680 = vadd.f32 0.0, %v679
    %v681 = vpop.f32.mrf.mxu0
    %682 = vmatprep.mubr.f32.mxu0 0.0
    %683 = vmatmul.mubr.f32.gmra.mxu0 %v554
    %v684 = vpop.f32.mrf.mxu0
    %v685 = vadd.f32 0.0, %v684
    %v686 = vpop.f32.mrf.mxu0
    %687 = vmatprep.mubr.f32.mxu0 0.0
    %688 = vmatmul.mubr.f32.gmra.mxu0 %v555
    %v689 = vpop.f32.mrf.mxu0
    %v690 = vadd.f32 0.0, %v689
    %v691 = vpop.f32.mrf.mxu0
    %692 = vmatprep.mubr.f32.mxu0 0.0
    %693 = vmatmul.mubr.f32.gmra.mxu0 %v556
    %v694 = vpop.f32.mrf.mxu0
    %v695 = vadd.f32 0.0, %v694
    %v696 = vpop.f32.mrf.mxu0
    %697 = vmatprep.mubr.f32.mxu0 0.0
    %698 = vmatmul.mubr.f32.gmra.mxu0 %v557
    %v699 = vpop.f32.mrf.mxu0
    %v700 = vadd.f32 0.0, %v699
    %v701 = vpop.f32.mrf.mxu0
    %702 = vdwg.mxu0
    %v703 = vsub.f32 %v625, 2.0
    %v704 = vsub.f32 %v630, 2.0
    %v705 = vsub.f32 %v635, 2.0
    %v706 = vsub.f32 %v640, 2.0
    %v707 = vsub.f32 %v645, 2.0
    %v708 = vsub.f32 %v650, 2.0
    %v709 = vsub.f32 %v655, 2.0
    %v710 = vsub.f32 %v660, 2.0
    %v711 = vsub.f32 %v665, 2.0
    %v712 = vsub.f32 %v670, 2.0
    %v713 = vsub.f32 %v675, 2.0
    %v714 = vsub.f32 %v680, 2.0
    %v715 = vsub.f32 %v685, 2.0
    %v716 = vsub.f32 %v690, 2.0
    %v717 = vsub.f32 %v695, 2.0
    %v718 = vsub.f32 %v700, 2.0
    %v719 = vmul.f32 %v703, %v625
    %v720 = vmul.f32 %v704, %v630
    %v721 = vmul.f32 %v705, %v635
    %v722 = vmul.f32 %v706, %v640
    %v723 = vmul.f32 %v707, %v645
    %v724 = vmul.f32 %v708, %v650
    %v725 = vmul.f32 %v709, %v655
    %v726 = vmul.f32 %v710, %v660
    %v727 = vmul.f32 %v711, %v665
    %v728 = vmul.f32 %v712, %v670
    %v729 = vmul.f32 %v713, %v675
    %v730 = vmul.f32 %v714, %v680
    %v731 = vmul.f32 %v715, %v685
    %v732 = vmul.f32 %v716, %v690
    %v733 = vmul.f32 %v717, %v695
    %v734 = vmul.f32 %v718, %v700
    %v735 = vlaneseq
    %v736 = vshrl.u32 %v735, 7
    %v737 = vsub.s32 4, %v736
    %v738 = vrot.slane %v120, %v737
    %v739 = vmul.f32 %v719, %v738
    %v740 = vmul.f32 %v720, %v738
    %v741 = vmul.f32 %v721, %v738
    %v742 = vmul.f32 %v722, %v738
    %v743 = vmul.f32 %v723, %v738
    %v744 = vmul.f32 %v724, %v738
    %v745 = vmul.f32 %v725, %v738
    %v746 = vmul.f32 %v726, %v738
    %v747 = vmul.f32 %v727, %v738
    %v748 = vmul.f32 %v728, %v738
    %v749 = vmul.f32 %v729, %v738
    %v750 = vmul.f32 %v730, %v738
    %v751 = vmul.f32 %v731, %v738
    %v752 = vmul.f32 %v732, %v738
    %v753 = vmul.f32 %v733, %v738
    %v754 = vmul.f32 %v734, %v738
    %755 = vadd.xlane.f32.xlu0 %v739
    %v756 = vpop.xlane.xlu0 %755
    %757 = vadd.xlane.f32.xlu0 %v740
    %v758 = vpop.xlane.xlu0 %757
    %759 = vadd.xlane.f32.xlu0 %v741
    %v760 = vpop.xlane.xlu0 %759
    %761 = vadd.xlane.f32.xlu0 %v742
    %v762 = vpop.xlane.xlu0 %761
    %763 = vadd.xlane.f32.xlu0 %v743
    %v764 = vpop.xlane.xlu0 %763
    %765 = vadd.xlane.f32.xlu0 %v744
    %v766 = vpop.xlane.xlu0 %765
    %767 = vadd.xlane.f32.xlu0 %v745
    %v768 = vpop.xlane.xlu0 %767
    %769 = vadd.xlane.f32.xlu0 %v746
    %v770 = vpop.xlane.xlu0 %769
    %771 = vadd.xlane.f32.xlu0 %v747
    %v772 = vpop.xlane.xlu0 %771
    %773 = vadd.xlane.f32.xlu0 %v748
    %v774 = vpop.xlane.xlu0 %773
    %775 = vadd.xlane.f32.xlu0 %v749
    %v776 = vpop.xlane.xlu0 %775
    %777 = vadd.xlane.f32.xlu0 %v750
    %v778 = vpop.xlane.xlu0 %777
    %779 = vadd.xlane.f32.xlu0 %v751
    %v780 = vpop.xlane.xlu0 %779
    %781 = vadd.xlane.f32.xlu0 %v752
    %v782 = vpop.xlane.xlu0 %781
    %783 = vadd.xlane.f32.xlu0 %v753
    %v784 = vpop.xlane.xlu0 %783
    %785 = vadd.xlane.f32.xlu0 %v754
    %v786 = vpop.xlane.xlu0 %785
    %v787 = vadd.f32 %v756, %v758
    %v788 = vadd.f32 %v787, %v760
    %v789 = vadd.f32 %v788, %v762
    %v790 = vadd.f32 %v789, %v764
    %v791 = vadd.f32 %v790, %v766
    %v792 = vadd.f32 %v791, %v768
    %v793 = vadd.f32 %v792, %v770
    %v794 = vadd.f32 %v793, %v772
    %v795 = vadd.f32 %v794, %v774
    %v796 = vadd.f32 %v795, %v776
    %v797 = vadd.f32 %v796, %v778
    %v798 = vadd.f32 %v797, %v780
    %v799 = vadd.f32 %v798, %v782
    %v800 = vadd.f32 %v799, %v784
    %v801 = vadd.f32 %v800, %v786
    %v802 = vrot.slane %v801, 4
    %v803 = vadd.f32 %v801, %v802
    %v804 = vrot.slane %v803, 2
    %v805 = vadd.f32 %v803, %v804
    %v806 = vrot.slane %v805, 1
    %v807 = vadd.f32 %v805, %v806
    %v808 = vadd.f32 %v525, %v807
    %v809 = vadd.f32 %v808, 176.0
    %v810 = vmul.f32 %v121, %v121
    %vm811 = vcmask 1045504
    %v812 = vsel %vm811, %v810, 0.0
    %813 = vadd.xlane.f32.xlu0 %v812
    %v814 = vpop.xlane.xlu0 %813
    %v815 = vsub.f32 %v814, 1.0
    %v816 = vmax.f32 %v815, 0.0
    %v817 = vsel %vm811, %v816, 0.0
    %v818 = vrot.slane %v817, 4
    %v819 = vadd.f32 %v817, %v818
    %v820 = vrot.slane %v819, 2
    %v821 = vadd.f32 %v819, %v820
    %v822 = vrot.slane %v821, 1
    %v823 = vadd.f32 %v821, %v822
    %v824 = vadd.f32 %v809, %v823
    %v825 = vmul.f32 %v824, 1000.0
    %v826 = vadd.f32 %v243, %v825
    %vm827 = vcmask 0
    %828 = vst.msk [vmem:[#allocation11] sm:$0x1] %vm827, %v826
    // Predicated region
    $region42: #{tpu_custom_call.1} parent=1 // pred_check
      _
    $region43: #{tpu_custom_call.1} parent=1 // pred_check_branch
      %830 = sbr.rel (0) target = $region45
    $region44: #{tpu_custom_call.1} parent=1 // pred_region
      %s832 = ssub.s32 16, 16
      %833 = vsyncadd [#allocation4], %s832
      %s835 = sshll.u32 [#allocation11], 4
      %s836 = int_to_ptr.vmem [resolvable:$true] %s835
      %838 = dma.vmem_to_hbm [thread:$0]  %s836, 16, %s5, [#allocation4]
    $region45: #{tpu_custom_call.1} parent=1 // pred_fallthru
      _
    // Predicated region
    $region46: #{tpu_custom_call.1} parent=1 // pred_check
      _
    $region47: #{tpu_custom_call.1} parent=1 // pred_check_branch
      %840 = sbr.rel (0) target = $region49
    $region48: #{tpu_custom_call.1} parent=1 // pred_region
      %841 = dma.done [#allocation4], 16
    $region49: #{tpu_custom_call.1} parent=1 // pred_fallthru
      _
    %842 = vsyncpa [#allocation3], 1
    %843 = vsyncpa [#allocation6], 1
    %844 = vsyncpa [#allocation9], 1
    %845 = vsyncpa [#allocation4], 1

</llo_original>
